<compile_context>
chip_gen: v7x
topology: tpu7x:2x2x1
jax: 0.10.0
libtpu: 0.0.40
codegen_flags: <defaults>
</compile_context>

<pallas_src>
import numpy as np
import jax
import jax.numpy as jnp
from jax.experimental import pallas as pl
from jax.experimental.pallas import tpu as pltpu

# hparams: dT=4, sst=True, loc_estim=True, init_err_scaling=-1.0
DT = 4
B, H, W = 2, 16, 16
HW = H * W
C_X = 5 * DT        # shape_data = 5*dT  (loc_estim sanity check)
C_SSH = 2 * DT      # ssh channels
C_SST = DT          # sst channels
K_SSH = 9 * C_SSH   # 72  im2col K for conv11
K_SST = 9 * C_SST   # 36  im2col K for conv21 / conv_m
K_TOT = K_SSH + K_SST
INIT_ERR_SCALING = -1.0


def _model_kernel(ef_ref, x_ref, yssh_ref, p_ref, w_ref, dyouts_ref, dyout1_ref):
    """Single invocation, both batch elements.  Layout (B, C, H*W): 256 lanes."""
    ef = ef_ref[0, 0]                       # 10 ** err_scaling (scalar, SMEM)
    x = x_ref[...]                          # (B, 5*DT, HW)
    y = yssh_ref[...]                       # (B, 2*DT, HW)  (== mask_ssh)

    # dyouts = (yhat_g + yhat_l - 2*y_ssh) * y_ssh, split per channel half.
    yl = y[:, 0:DT, :]
    yh = y[:, DT:2 * DT, :]
    lo = 2.0 * (x[:, 0:DT, :] - yl) * yl
    hi = (x[:, DT:2 * DT, :] + x[:, 3 * DT:4 * DT, :]
          + ef * (x[:, 2 * DT:3 * DT, :] + x[:, 4 * DT:5 * DT, :])
          - 2.0 * yh) * yh
    dyouts_ref[...] = jnp.concatenate([lo, hi], axis=1)   # full (B, 8, 256) store

    # Consolidated convs: one (12, 108) x (108, 256) matmul per batch element.
    # Rows 0:4 = conv11(yhat_no_err), 4:8 = conv21(y_sst), 8:12 = conv_m(y_sst).
    w = w_ref[...]                          # (3*DT, K_TOT)
    for b in range(B):                      # static unroll, B = 2
        conv = jnp.dot(w, p_ref[b], preferred_element_type=jnp.float32)  # (12, HW)
        dyout1_ref[b] = ((conv[0:DT, :] - conv[DT:2 * DT, :])
                         * jax.nn.sigmoid(conv[2 * DT:3 * DT, :]))


def model_forward(x_nchw, y_ssh_nchw, y_sst_nchw, w11_hwio, w21_hwio, wm_hwio,
                  err_scaling):
    """Wrapper: NCHW in/out; kernel works on (B, C, H*W) with spatial on lanes."""
    x = x_nchw.reshape(B, 5 * DT, HW).astype(jnp.float32)
    y_ssh = y_ssh_nchw.reshape(B, 2 * DT, HW).astype(jnp.float32)

    # im2col (3x3, padding=1); K ordered as (tap = dh*3+dw, cin).
    def im2col(v):  # (B, C, H, W) -> (B, 9*C, H*W)
        vp = jnp.pad(v, ((0, 0), (0, 0), (1, 1), (1, 1)))
        cols = [vp[:, :, dh:dh + H, dw:dw + W]
                for dh in range(3) for dw in range(3)]
        return jnp.concatenate(cols, axis=1).reshape(B, 9 * v.shape[1], HW)

    yhat_no_err = x_nchw[:, :2 * DT]        # cat(x_lr, x_hr_glob) = first 2*dT ch.
    p = jnp.concatenate([im2col(yhat_no_err.astype(jnp.float32)),
                         im2col(y_sst_nchw.astype(jnp.float32))],
                        axis=1)             # (B, 108, HW)

    # Block-diagonal weight so conv11 | conv21 | conv_m become one matmul.
    def flat(w):  # HWIO (3,3,Cin,Cout) -> (Cout, 9*Cin), K order (tap, cin)
        return jnp.transpose(w.reshape(9 * w.shape[2], w.shape[3])).astype(jnp.float32)

    z_ssh = jnp.zeros((DT, K_SSH), jnp.float32)
    z_sst = jnp.zeros((DT, K_SST), jnp.float32)
    w_block = jnp.concatenate([
        jnp.concatenate([flat(w11_hwio), z_sst], axis=1),
        jnp.concatenate([z_ssh, flat(w21_hwio)], axis=1),
        jnp.concatenate([z_ssh, flat(wm_hwio)], axis=1),
    ], axis=0)                              # (3*DT, 108)

    # err factor 10 ** err_scaling as an SMEM scalar.
    ef = jnp.reshape(jnp.float32(10.0) ** err_scaling, (1, 1)).astype(jnp.float32)

    dyouts, dyout1 = pl.pallas_call(
        _model_kernel,
        out_shape=[
            jax.ShapeDtypeStruct((B, 2 * DT, HW), jnp.float32),
            jax.ShapeDtypeStruct((B, DT, HW), jnp.float32),
        ],
        in_specs=[
            pl.BlockSpec(memory_space=pltpu.MemorySpace.SMEM),   # ef (scalar)
            pl.BlockSpec(memory_space=pltpu.MemorySpace.VMEM),   # x
            pl.BlockSpec(memory_space=pltpu.MemorySpace.VMEM),   # y_ssh
            pl.BlockSpec(memory_space=pltpu.MemorySpace.VMEM),   # im2col patches
            pl.BlockSpec(memory_space=pltpu.MemorySpace.VMEM),   # block-diag weight
        ],
        out_specs=[
            pl.BlockSpec(memory_space=pltpu.MemorySpace.VMEM),   # dyouts
            pl.BlockSpec(memory_space=pltpu.MemorySpace.VMEM),   # dyout1
        ],
    )(ef, x, y_ssh, p, w_block)

    # Back to PyTorch NCHW convention (free reshapes, no transpose).
    return dyouts.reshape(B, 2 * DT, H, W), dyout1.reshape(B, DT, H, W)


def reference_forward(x, y_ssh, y_sst, w11_hwio, w21_hwio, wm_hwio, err_scaling):
    """Pure-JAX reference (NCHW), mirrors the PyTorch module."""
    ef = jnp.float32(10.0) ** err_scaling
    x_lr, x_hr_g, x_er_g, x_hr_l, x_er_l = jnp.split(x, 5, axis=1)
    yhat_no_err = jnp.concatenate([x_lr, x_hr_g], axis=1)
    yhat_g = jnp.concatenate([x_lr, x_hr_g + x_er_g * ef], axis=1)
    yhat_l = jnp.concatenate([x_lr, x_hr_l + x_er_l * ef], axis=1)

    def conv(inp, w):
        return jax.lax.conv_general_dilated(
            inp, w, window_strides=(1, 1), padding="SAME",
            dimension_numbers=("NCHW", "HWIO", "NCHW"),
            precision=jax.lax.Precision.HIGHEST)

    dyout1 = (conv(yhat_no_err, w11_hwio) - conv(y_sst, w21_hwio)) \
        * jax.nn.sigmoid(conv(y_sst, wm_hwio))
    mask_ssh = y_ssh  # module: mask_ssh, mask_sst = y  (use_sst=True)
    dyouts = (yhat_g - y_ssh) * mask_ssh + (yhat_l - y_ssh) * mask_ssh
    return dyouts, dyout1


if __name__ == "__main__":
    key = jax.random.PRNGKey(0)
    kx, kssh, ksst, k11, k21, km = jax.random.split(key, 6)

    x = jax.random.normal(kx, (B, C_X, H, W), dtype=jnp.float32)
    y_ssh = jax.random.normal(kssh, (B, C_SSH, H, W), dtype=jnp.float32)
    y_sst = jax.random.normal(ksst, (B, C_SST, H, W), dtype=jnp.float32)

    # Deterministic synthetic conv weights (HWIO), same shapes as the module:
    #   conv11: Conv2d(2*dT -> dT, 3x3), conv21 / conv_m: Conv2d(dT -> dT, 3x3)
    w11 = 0.1 * jax.random.normal(k11, (3, 3, 2 * DT, DT), dtype=jnp.float32)
    w21 = 0.1 * jax.random.normal(k21, (3, 3, DT, DT), dtype=jnp.float32)
    wm = 0.1 * jax.random.normal(km, (3, 3, DT, DT), dtype=jnp.float32)
    err_scaling = jnp.float32(INIT_ERR_SCALING)   # self.err_scaling parameter

    fwd = jax.jit(model_forward)
    dyouts, dyout1 = fwd(x, y_ssh, y_sst, w11, w21, wm, err_scaling)
    jax.block_until_ready((dyouts, dyout1))

    ref_dyouts, ref_dyout1 = reference_forward(x, y_ssh, y_sst, w11, w21, wm,
                                               err_scaling)
    np.testing.assert_allclose(np.asarray(dyouts), np.asarray(ref_dyouts),
                               rtol=1e-4, atol=1e-4)
    np.testing.assert_allclose(np.asarray(dyout1), np.asarray(ref_dyout1),
                               rtol=1e-4, atol=1e-4)

    print("KERNEL_OK")
</pallas_src>

<mosaic_0001>
module attributes {stable_mosaic.version = 11 : i64} {
  func.func @_model_kernel(%arg0: memref<1x1xf32, #tpu.memory_space<smem>>, %arg1: memref<2x20x256xf32, #tpu.memory_space<vmem>>, %arg2: memref<2x8x256xf32, #tpu.memory_space<vmem>>, %arg3: memref<2x108x256xf32, #tpu.memory_space<vmem>>, %arg4: memref<12x108xf32, #tpu.memory_space<vmem>>, %arg5: memref<2x8x256xf32, #tpu.memory_space<vmem>>, %arg6: memref<2x4x256xf32, #tpu.memory_space<vmem>>) attributes {dimension_semantics = [], scalar_prefetch = 0 : i64, scratch_operands = 0 : i64, tpu.core_type = #tpu.core_type<tc>} {
    %c0 = arith.constant 0 : index
    %c0_0 = arith.constant 0 : index
    %0 = memref.load %arg0[%c0, %c0_0] : memref<1x1xf32, #tpu.memory_space<smem>>
    %c0_1 = arith.constant 0 : index
    %c0_2 = arith.constant 0 : index
    %c0_3 = arith.constant 0 : index
    %1 = vector.load %arg1[%c0_1, %c0_2, %c0_3] : memref<2x20x256xf32, #tpu.memory_space<vmem>>, vector<2x20x256xf32>
    %c0_4 = arith.constant 0 : index
    %c0_5 = arith.constant 0 : index
    %c0_6 = arith.constant 0 : index
    %2 = vector.load %arg2[%c0_4, %c0_5, %c0_6] : memref<2x8x256xf32, #tpu.memory_space<vmem>>, vector<2x8x256xf32>
    %3 = vector.extract_strided_slice %2 {offsets = [0, 0, 0], sizes = [2, 4, 256], strides = [1, 1, 1]} : vector<2x8x256xf32> to vector<2x4x256xf32>
    %4 = vector.extract_strided_slice %2 {offsets = [0, 4, 0], sizes = [2, 4, 256], strides = [1, 1, 1]} : vector<2x8x256xf32> to vector<2x4x256xf32>
    %5 = vector.extract_strided_slice %1 {offsets = [0, 0, 0], sizes = [2, 4, 256], strides = [1, 1, 1]} : vector<2x20x256xf32> to vector<2x4x256xf32>
    %6 = arith.subf %5, %3 : vector<2x4x256xf32>
    %cst = arith.constant 2.000000e+00 : f32
    %7 = vector.broadcast %cst : f32 to vector<2x4x256xf32>
    %8 = arith.mulf %7, %6 : vector<2x4x256xf32>
    %9 = arith.mulf %8, %3 : vector<2x4x256xf32>
    %10 = vector.extract_strided_slice %1 {offsets = [0, 4, 0], sizes = [2, 4, 256], strides = [1, 1, 1]} : vector<2x20x256xf32> to vector<2x4x256xf32>
    %11 = vector.extract_strided_slice %1 {offsets = [0, 12, 0], sizes = [2, 4, 256], strides = [1, 1, 1]} : vector<2x20x256xf32> to vector<2x4x256xf32>
    %12 = arith.addf %10, %11 : vector<2x4x256xf32>
    %13 = vector.extract_strided_slice %1 {offsets = [0, 8, 0], sizes = [2, 4, 256], strides = [1, 1, 1]} : vector<2x20x256xf32> to vector<2x4x256xf32>
    %14 = vector.extract_strided_slice %1 {offsets = [0, 16, 0], sizes = [2, 4, 256], strides = [1, 1, 1]} : vector<2x20x256xf32> to vector<2x4x256xf32>
    %15 = arith.addf %13, %14 : vector<2x4x256xf32>
    %16 = vector.broadcast %0 : f32 to vector<2x4x256xf32>
    %17 = arith.mulf %16, %15 : vector<2x4x256xf32>
    %18 = arith.addf %12, %17 : vector<2x4x256xf32>
    %cst_7 = arith.constant 2.000000e+00 : f32
    %19 = vector.broadcast %cst_7 : f32 to vector<2x4x256xf32>
    %20 = arith.mulf %19, %4 : vector<2x4x256xf32>
    %21 = arith.subf %18, %20 : vector<2x4x256xf32>
    %22 = arith.mulf %21, %4 : vector<2x4x256xf32>
    %23 = tpu.concatenate %9, %22 in 1 : vector<2x4x256xf32>, vector<2x4x256xf32> -> vector<2x8x256xf32>
    %c0_8 = arith.constant 0 : index
    %c0_9 = arith.constant 0 : index
    %c0_10 = arith.constant 0 : index
    %24 = vector.load %arg5[%c0_8, %c0_9, %c0_10] : memref<2x8x256xf32, #tpu.memory_space<vmem>>, vector<2x8x256xf32>
    tpu.vector_store %arg5[%c0_8, %c0_9, %c0_10], %23 {strides = array<i32>} : memref<2x8x256xf32, #tpu.memory_space<vmem>>, vector<2x8x256xf32>,
    %c0_11 = arith.constant 0 : index
    %c0_12 = arith.constant 0 : index
    %25 = vector.load %arg4[%c0_11, %c0_12] : memref<12x108xf32, #tpu.memory_space<vmem>>, vector<12x108xf32>
    %c0_13 = arith.constant 0 : index
    %c0_14 = arith.constant 0 : index
    %c0_15 = arith.constant 0 : index
    %26 = vector.load %arg3[%c0_13, %c0_14, %c0_15] : memref<2x108x256xf32, #tpu.memory_space<vmem>>, vector<1x108x256xf32>
    %27 = vector.shape_cast %26 : vector<1x108x256xf32> to vector<108x256xf32>
    %cst_16 = arith.constant dense<0.000000e+00> : vector<12x256xf32>
    %28 = tpu.matmul %25, %27, %cst_16 {dimension_numbers = #tpu.dot_dimension_numbers<[1], [0], [0], [1], [0, 0, 1, 1], [], []>} : vector<12x108xf32>, vector<108x256xf32>, vector<12x256xf32> -> vector<12x256xf32>
    %29 = vector.extract_strided_slice %28 {offsets = [0, 0], sizes = [4, 256], strides = [1, 1]} : vector<12x256xf32> to vector<4x256xf32>
    %30 = vector.extract_strided_slice %28 {offsets = [4, 0], sizes = [4, 256], strides = [1, 1]} : vector<12x256xf32> to vector<4x256xf32>
    %31 = arith.subf %29, %30 : vector<4x256xf32>
    %32 = vector.extract_strided_slice %28 {offsets = [8, 0], sizes = [4, 256], strides = [1, 1]} : vector<12x256xf32> to vector<4x256xf32>
    %33 = arith.negf %32 : vector<4x256xf32>
    %34 = math.exp %33 : vector<4x256xf32>
    %cst_17 = arith.constant 1.000000e+00 : f32
    %35 = vector.broadcast %cst_17 : f32 to vector<4x256xf32>
    %36 = arith.addf %35, %34 : vector<4x256xf32>
    %37 = arith.divf %35, %36 : vector<4x256xf32>
    %38 = arith.mulf %31, %37 : vector<4x256xf32>
    %c0_18 = arith.constant 0 : index
    %c0_19 = arith.constant 0 : index
    %c0_20 = arith.constant 0 : index
    %39 = vector.load %arg6[%c0_18, %c0_19, %c0_20] : memref<2x4x256xf32, #tpu.memory_space<vmem>>, vector<1x4x256xf32>
    %40 = vector.shape_cast %39 : vector<1x4x256xf32> to vector<4x256xf32>
    %41 = vector.shape_cast %38 : vector<4x256xf32> to vector<1x4x256xf32>
    tpu.vector_store %arg6[%c0_18, %c0_19, %c0_20], %41 {strides = array<i32>} : memref<2x4x256xf32, #tpu.memory_space<vmem>>, vector<1x4x256xf32>,
    %c1 = arith.constant 1 : index
    %c0_21 = arith.constant 0 : index
    %c0_22 = arith.constant 0 : index
    %42 = vector.load %arg3[%c1, %c0_21, %c0_22] : memref<2x108x256xf32, #tpu.memory_space<vmem>>, vector<1x108x256xf32>
    %43 = vector.shape_cast %42 : vector<1x108x256xf32> to vector<108x256xf32>
    %cst_23 = arith.constant dense<0.000000e+00> : vector<12x256xf32>
    %44 = tpu.matmul %25, %43, %cst_23 {dimension_numbers = #tpu.dot_dimension_numbers<[1], [0], [0], [1], [0, 0, 1, 1], [], []>} : vector<12x108xf32>, vector<108x256xf32>, vector<12x256xf32> -> vector<12x256xf32>
    %45 = vector.extract_strided_slice %44 {offsets = [0, 0], sizes = [4, 256], strides = [1, 1]} : vector<12x256xf32> to vector<4x256xf32>
    %46 = vector.extract_strided_slice %44 {offsets = [4, 0], sizes = [4, 256], strides = [1, 1]} : vector<12x256xf32> to vector<4x256xf32>
    %47 = arith.subf %45, %46 : vector<4x256xf32>
    %48 = vector.extract_strided_slice %44 {offsets = [8, 0], sizes = [4, 256], strides = [1, 1]} : vector<12x256xf32> to vector<4x256xf32>
    %49 = arith.negf %48 : vector<4x256xf32>
    %50 = math.exp %49 : vector<4x256xf32>
    %cst_24 = arith.constant 1.000000e+00 : f32
    %51 = vector.broadcast %cst_24 : f32 to vector<4x256xf32>
    %52 = arith.addf %51, %50 : vector<4x256xf32>
    %53 = arith.divf %51, %52 : vector<4x256xf32>
    %54 = arith.mulf %47, %53 : vector<4x256xf32>
    %c1_25 = arith.constant 1 : index
    %c0_26 = arith.constant 0 : index
    %c0_27 = arith.constant 0 : index
    %55 = vector.load %arg6[%c1_25, %c0_26, %c0_27] : memref<2x4x256xf32, #tpu.memory_space<vmem>>, vector<1x4x256xf32>
    %56 = vector.shape_cast %55 : vector<1x4x256xf32> to vector<4x256xf32>
    %57 = vector.shape_cast %54 : vector<4x256xf32> to vector<1x4x256xf32>
    tpu.vector_store %arg6[%c1_25, %c0_26, %c0_27], %57 {strides = array<i32>} : memref<2x4x256xf32, #tpu.memory_space<vmem>>, vector<1x4x256xf32>,
    return
  }
}

</mosaic_0001>

<llo_original>
// kernel: model_forward.1
$region0: #{model_forward.1}
  #allocation0 [shape = 'u32[]', space=smem, size = 0x4, offset = 0x4, fixed_abs, tag = 'smem constant byte address 0x4 - core index']
  #allocation1 [shape = 'u32[144,128]{1,0:T(1,128)}', space=vmem, size = 0x12000, scoped, tag = 'internal scratch']
  #allocation2 [shape = 'f32[1,1]{1,0:T(1,128)S(6)}', space=smem, size = 0x200, scoped, tag = 'scoped memory for model_forward.1']
  %s0 = inlined_call_operand.<no memory space> [shape: f32[1,1], index: 0, kind: input, shape index: {}]
  %s1 = inlined_call_operand.vmem [shape: f32[2,20,256], index: 1, kind: input, shape index: {}]
  %s2 = inlined_call_operand.vmem [shape: f32[2,8,256], index: 2, kind: input, shape index: {}]
  %s3 = inlined_call_operand.vmem [shape: f32[2,108,256], index: 3, kind: input, shape index: {}]
  %s4 = inlined_call_operand.vmem [shape: f32[12,108], index: 4, kind: input, shape index: {}]
  %s5 = inlined_call_operand.vmem [shape: f32[2,8,256], index: 5, kind: output, shape index: {0}]
  %s6 = inlined_call_operand.vmem [shape: f32[2,4,256], index: 6, kind: output, shape index: {1}]
  %7 = xla_tuple %s5, %s6
  %s8 = sld [smem:[#allocation0]]
  $region38: #{model_forward.1} parent=0
    _
  %s10 = ssub.s32 1, %s8
  %s11 = scalar_select 0, %s10, %s8
  %12 = sst [smem:[#allocation2]] %s0
  // Predicated region
  $region2: #{model_forward.1} parent=0 // pred_check
    _
  $region3: #{model_forward.1} parent=0 // pred_check_branch
    %14 = sbr.rel (0) target = $region5
  $region4: #{model_forward.1} parent=0 // pred_region
    _
  $region5: #{model_forward.1} parent=0 // pred_fallthru
    _
  // Predicated region
  $region6: #{model_forward.1} parent=0 // pred_check
    _
  $region7: #{model_forward.1} parent=0 // pred_check_branch
    %16 = sbr.rel (0) target = $region9
  $region8: #{model_forward.1} parent=0 // pred_region
    _
  $region9: #{model_forward.1} parent=0 // pred_fallthru
    _
  // Predicated region
  $region10: #{model_forward.1} parent=0 // pred_check
    _
  $region11: #{model_forward.1} parent=0 // pred_check_branch
    %18 = sbr.rel (0) target = $region13
  $region12: #{model_forward.1} parent=0 // pred_region
    _
  $region13: #{model_forward.1} parent=0 // pred_fallthru
    _
  // Predicated region
  $region14: #{model_forward.1} parent=0 // pred_check
    _
  $region15: #{model_forward.1} parent=0 // pred_check_branch
    %20 = sbr.rel (0) target = $region17
  $region16: #{model_forward.1} parent=0 // pred_region
    _
  $region17: #{model_forward.1} parent=0 // pred_fallthru
    _
  // Predicated region
  $region18: #{model_forward.1} parent=0 // pred_check
    _
  $region19: #{model_forward.1} parent=0 // pred_check_branch
    %22 = sbr.rel (0) target = $region21
  $region20: #{model_forward.1} parent=0 // pred_region
    _
  $region21: #{model_forward.1} parent=0 // pred_fallthru
    _
  %s23 = sld [smem:[#allocation2]]
  %v24 = vld [vmem:[%s1] sm:$0xff]
  %v25 = vld [vmem:[%s1 + $0x8] sm:$0xff]
  %v26 = vld [vmem:[%s1 + $0x10] sm:$0xff]
  %v27 = vld [vmem:[%s1 + $0x18] sm:$0xff]
  %v28 = vld [vmem:[%s1 + $0x20] sm:$0xf]
  %v29 = vld [vmem:[%s1 + $0x28] sm:$0xf]
  %v30 = vld [vmem:[%s1 + $0x30] sm:$0xff]
  %v31 = vld [vmem:[%s1 + $0x38] sm:$0xff]
  %v32 = vld [vmem:[%s1 + $0x40] sm:$0xff]
  %v33 = vld [vmem:[%s1 + $0x48] sm:$0xff]
  %v34 = vld [vmem:[%s1 + $0x50] sm:$0xf]
  %v35 = vld [vmem:[%s1 + $0x58] sm:$0xf]
  %v36 = vld [vmem:[%s2] sm:$0xff]
  %v37 = vld [vmem:[%s2 + $0x8] sm:$0xff]
  %v38 = vld [vmem:[%s2 + $0x10] sm:$0xff]
  %v39 = vld [vmem:[%s2 + $0x18] sm:$0xff]
  %v40 = vsub.f32 %v24, %v36
  %v41 = vsub.f32 %v25, %v37
  %v42 = vsub.f32 %v30, %v38
  %v43 = vsub.f32 %v31, %v39
  %v44 = vmul.f32 %v40, 2.0
  %v45 = vmul.f32 %v41, 2.0
  %v46 = vmul.f32 %v42, 2.0
  %v47 = vmul.f32 %v43, 2.0
  %v48 = vmul.f32 %v44, %v36
  %v49 = vmul.f32 %v45, %v37
  %v50 = vmul.f32 %v46, %v38
  %v51 = vmul.f32 %v47, %v39
  %v52 = vadd.f32 %v24, %v26
  %v53 = vadd.f32 %v25, %v27
  %v54 = vadd.f32 %v30, %v32
  %v55 = vadd.f32 %v31, %v33
  %v56 = vadd.f32 %v26, %v28
  %v57 = vadd.f32 %v27, %v29
  %v58 = vadd.f32 %v32, %v34
  %v59 = vadd.f32 %v33, %v35
  %v60 = vstv %s23
  %v61 = vmul.f32 %v60, %v56
  %v62 = vmul.f32 %v60, %v57
  %v63 = vmul.f32 %v60, %v58
  %v64 = vmul.f32 %v60, %v59
  %v69 = vrot.slane %v61, 4
  %v70 = vrot.slane %v62, 4
  %v71 = vrot.slane %v63, 4
  %v72 = vrot.slane %v64, 4
  %v77 = vadd.f32 %v52, %v69
  %v78 = vadd.f32 %v53, %v70
  %v79 = vadd.f32 %v54, %v71
  %v80 = vadd.f32 %v55, %v72
  %v81 = vmul.f32 %v36, 2.0
  %v82 = vmul.f32 %v37, 2.0
  %v83 = vmul.f32 %v38, 2.0
  %v84 = vmul.f32 %v39, 2.0
  %v85 = vsub.f32 %v77, %v81
  %v86 = vsub.f32 %v78, %v82
  %v87 = vsub.f32 %v79, %v83
  %v88 = vsub.f32 %v80, %v84
  %v89 = vmul.f32 %v85, %v36
  %v90 = vmul.f32 %v86, %v37
  %v91 = vmul.f32 %v87, %v38
  %v92 = vmul.f32 %v88, %v39
  %vm93 = vcmask 1043456
  %v94 = vsel %vm93, %v48, %v89
  %v95 = vsel %vm93, %v49, %v90
  %v96 = vsel %vm93, %v50, %v91
  %v97 = vsel %vm93, %v51, %v92
  %98 = vst [vmem:[%s5] sm:$0xff] %v94
  %99 = vst [vmem:[%s5 + $0x8] sm:$0xff] %v95
  %100 = vst [vmem:[%s5 + $0x10] sm:$0xff] %v96
  %101 = vst [vmem:[%s5 + $0x18] sm:$0xff] %v97
  %v102 = vld [vmem:[%s4] sm:$0xff]
  %v103 = vld [vmem:[%s4 + $0x8] sm:$0xf]
  %v104 = vld [vmem:[%s3] sm:$0xff]
  %v105 = vld [vmem:[%s3 + $0x8] sm:$0xff]
  %v106 = vld [vmem:[%s3 + $0x10] sm:$0xff]
  %v107 = vld [vmem:[%s3 + $0x18] sm:$0xff]
  %v108 = vld [vmem:[%s3 + $0x20] sm:$0xff]
  %v109 = vld [vmem:[%s3 + $0x28] sm:$0xff]
  %v110 = vld [vmem:[%s3 + $0x30] sm:$0xff]
  %v111 = vld [vmem:[%s3 + $0x38] sm:$0xff]
  %v112 = vld [vmem:[%s3 + $0x40] sm:$0xff]
  %v113 = vld [vmem:[%s3 + $0x48] sm:$0xff]
  %v114 = vld [vmem:[%s3 + $0x50] sm:$0xff]
  %v115 = vld [vmem:[%s3 + $0x58] sm:$0xff]
  %v116 = vld [vmem:[%s3 + $0x60] sm:$0xff]
  %v117 = vld [vmem:[%s3 + $0x68] sm:$0xff]
  %v118 = vld [vmem:[%s3 + $0x70] sm:$0xff]
  %v119 = vld [vmem:[%s3 + $0x78] sm:$0xff]
  %v120 = vld [vmem:[%s3 + $0x80] sm:$0xff]
  %v121 = vld [vmem:[%s3 + $0x88] sm:$0xff]
  %v122 = vld [vmem:[%s3 + $0x90] sm:$0xff]
  %v123 = vld [vmem:[%s3 + $0x98] sm:$0xff]
  %v124 = vld [vmem:[%s3 + $0xa0] sm:$0xff]
  %v125 = vld [vmem:[%s3 + $0xa8] sm:$0xff]
  %v126 = vld [vmem:[%s3 + $0xb0] sm:$0xff]
  %v127 = vld [vmem:[%s3 + $0xb8] sm:$0xff]
  %v128 = vld [vmem:[%s3 + $0xc0] sm:$0xff]
  %v129 = vld [vmem:[%s3 + $0xc8] sm:$0xff]
  %v130 = vld [vmem:[%s3 + $0xd0] sm:$0xf]
  %v131 = vld [vmem:[%s3 + $0xd8] sm:$0xf]
  %vm132 = vcmask 883712
  %v134 = vsel %vm132, %v102, 0
  %v137 = vsel %vm132, %v103, 0
  %v140 = vsel %vm93, %v130, 0
  %v143 = vsel %vm93, %v131, 0
  %145 = vmatprep.subr.mxu0 %v105
  %146 = vmatpush1.msra.mxu0 %v104
  %147 = vmatprep.subr.mxu0 %v107
  %148 = vmatpush1.msra.mxu0 %v106
  %149 = vmatprep.subr.mxu0 %v109
  %150 = vmatpush1.msra.mxu0 %v108
  %151 = vmatprep.subr.mxu0 %v111
  %152 = vmatpush1.msra.mxu0 %v110
  %153 = vmatprep.subr.mxu0 %v113
  %154 = vmatpush1.msra.mxu0 %v112
  %155 = vmatprep.subr.mxu0 %v115
  %156 = vmatpush1.msra.mxu0 %v114
  %157 = vmatprep.subr.mxu0 %v117
  %158 = vmatpush1.msra.mxu0 %v116
  %159 = vmatprep.subr.mxu0 %v119
  %160 = vmatpush1.msra.mxu0 %v118
  %161 = vmatprep.subr.mxu0 %v121
  %162 = vmatpush1.msra.mxu0 %v120
  %163 = vmatprep.subr.mxu0 %v123
  %164 = vmatpush1.msra.mxu0 %v122
  %165 = vmatprep.subr.mxu0 %v125
  %166 = vmatpush1.msra.mxu0 %v124
  %167 = vmatprep.subr.mxu0 %v127
  %168 = vmatpush1.msra.mxu0 %v126
  %169 = vmatprep.subr.mxu0 %v129
  %170 = vmatpush1.msra.mxu0 %v128
  %171 = vmatprep.subr.mxu0 %v143
  %172 = vmatpush1.msra.mxu0 %v140
  %173 = vmatprep.subr.mxu0 0.0
  %174 = vmatpush1.msra.mxu0 0.0
  %175 = vmatprep.subr.mxu0 0.0
  %176 = vmatpush1.msra.mxu0 0.0
  %177 = vmatprep.subr.mxu0 0.0
  %178 = vmatpush1.msra.mxu0 0.0
  %179 = vmatprep.subr.mxu0 0.0
  %180 = vmatpush1.msra.mxu0 0.0
  %181 = vmatprep.subr.mxu0 0.0
  %182 = vmatpush1.msra.mxu0 0.0
  %183 = vmatprep.subr.mxu0 0.0
  %184 = vmatpush1.msra.mxu0 0.0
  %185 = vmatprep.subr.mxu0 0.0
  %186 = vmatpush1.msra.mxu0 0.0
  %187 = vmatprep.subr.mxu0 0.0
  %188 = vmatpush1.msra.mxu0 0.0
  %189 = vmatprep.subr.mxu0 0.0
  %190 = vmatpush1.msra.mxu0 0.0
  %191 = vmatprep.subr.mxu0 0.0
  %192 = vmatpush1.msra.mxu0 0.0
  %193 = vmatprep.subr.mxu0 0.0
  %194 = vmatpush1.msra.mxu0 0.0
  %195 = vmatprep.subr.mxu0 0.0
  %196 = vmatpush1.msra.mxu0 0.0
  %197 = vmatprep.subr.mxu0 0.0
  %198 = vmatpush1.msra.mxu0 0.0
  %199 = vmatprep.subr.mxu0 0.0
  %200 = vmatpush1.msra.mxu0 0.0
  %201 = vmatprep.subr.mxu0 0.0
  %202 = vmatpush1.msra.mxu0 0.0
  %203 = vmatprep.subr.mxu0 0.0
  %204 = vmatpush1.msra.mxu0 0.0
  %205 = vmatprep.subr.mxu0 0.0
  %206 = vmatpush1.msra.mxu0 0.0
  %207 = vmatprep.subr.mxu0 0.0
  %208 = vmatpush1.msra.mxu0 0.0
  %209 = vmatprep.mubr.f32.mxu0 0.0
  %210 = vmatmul.mubr.f32.gmra.mrb[0].mxu0 %v134
  %v211 = vpop.f32.mrb[0].mxu0
  %v212 = vadd.f32 0.0, %v211
  %v213 = vpop.f32.mrb[0].mxu0
  %v214 = vadd.f32 0.0, %v213
  %215 = vmatprep.mubr.f32.mxu0 0.0
  %216 = vmatmul.mubr.f32.gmra.mrb[0].mxu0 %v137
  %v217 = vpop.f32.mrb[0].mxu0
  %v218 = vadd.f32 0.0, %v217
  %v219 = vpop.f32.mrb[0].mxu0
  %v220 = vadd.f32 0.0, %v219
  %221 = vdwg.mxu0
  %v224 = vrot.slane %v212, 4
  %v225 = vrot.slane %v214, 4
  %v228 = vsub.f32 %v212, %v224
  %v229 = vsub.f32 %v214, %v225
  %v230 = vxor.u32 %v218, 2147483648
  %v231 = vxor.u32 %v220, 2147483648
  %v232 = vmul.f32 %v230, 1.442695
  %v233 = vpow.pop %v232
  %v234 = vmul.f32 %v231, 1.442695
  %v235 = vpow.pop %v234
  %v236 = vadd.f32 %v233, 1.0
  %v237 = vadd.f32 %v235, 1.0
  %v238 = vrcp.pop %v236
  %v239 = vmul.f32 1.0, %v238
  %v240 = vrcp.pop %v237
  %v241 = vmul.f32 1.0, %v240
  %v242 = vmul.f32 %v228, %v239
  %v243 = vmul.f32 %v229, %v241
  %v246 = vcombine.low %v242, %v243
  %248 = vst [vmem:[%s6] sm:$0xff] %v246
  %s249 = scalar_lea.vmem %s3, 224
  %v250 = vld [vmem:[%s249] sm:$0xff]
  %v251 = vld [vmem:[%s249 + $0x8] sm:$0xff]
  %v252 = vld [vmem:[%s249 + $0x10] sm:$0xff]
  %v253 = vld [vmem:[%s249 + $0x18] sm:$0xff]
  %v254 = vld [vmem:[%s249 + $0x20] sm:$0xff]
  %v255 = vld [vmem:[%s249 + $0x28] sm:$0xff]
  %v256 = vld [vmem:[%s249 + $0x30] sm:$0xff]
  %v257 = vld [vmem:[%s249 + $0x38] sm:$0xff]
  %v258 = vld [vmem:[%s249 + $0x40] sm:$0xff]
  %v259 = vld [vmem:[%s249 + $0x48] sm:$0xff]
  %v260 = vld [vmem:[%s249 + $0x50] sm:$0xff]
  %v261 = vld [vmem:[%s249 + $0x58] sm:$0xff]
  %v262 = vld [vmem:[%s249 + $0x60] sm:$0xff]
  %v263 = vld [vmem:[%s249 + $0x68] sm:$0xff]
  %v264 = vld [vmem:[%s249 + $0x70] sm:$0xff]
  %v265 = vld [vmem:[%s249 + $0x78] sm:$0xff]
  %v266 = vld [vmem:[%s249 + $0x80] sm:$0xff]
  %v267 = vld [vmem:[%s249 + $0x88] sm:$0xff]
  %v268 = vld [vmem:[%s249 + $0x90] sm:$0xff]
  %v269 = vld [vmem:[%s249 + $0x98] sm:$0xff]
  %v270 = vld [vmem:[%s249 + $0xa0] sm:$0xff]
  %v271 = vld [vmem:[%s249 + $0xa8] sm:$0xff]
  %v272 = vld [vmem:[%s249 + $0xb0] sm:$0xff]
  %v273 = vld [vmem:[%s249 + $0xb8] sm:$0xff]
  %v274 = vld [vmem:[%s249 + $0xc0] sm:$0xff]
  %v275 = vld [vmem:[%s249 + $0xc8] sm:$0xff]
  %v276 = vld [vmem:[%s249 + $0xd0] sm:$0xf]
  %v277 = vld [vmem:[%s249 + $0xd8] sm:$0xf]
  %v279 = vsel %vm93, %v276, 0
  %v282 = vsel %vm93, %v277, 0
  %284 = vmatprep.subr.mxu0 %v251
  %285 = vmatpush1.msra.mxu0 %v250
  %286 = vmatprep.subr.mxu0 %v253
  %287 = vmatpush1.msra.mxu0 %v252
  %288 = vmatprep.subr.mxu0 %v255
  %289 = vmatpush1.msra.mxu0 %v254
  %290 = vmatprep.subr.mxu0 %v257
  %291 = vmatpush1.msra.mxu0 %v256
  %292 = vmatprep.subr.mxu0 %v259
  %293 = vmatpush1.msra.mxu0 %v258
  %294 = vmatprep.subr.mxu0 %v261
  %295 = vmatpush1.msra.mxu0 %v260
  %296 = vmatprep.subr.mxu0 %v263
  %297 = vmatpush1.msra.mxu0 %v262
  %298 = vmatprep.subr.mxu0 %v265
  %299 = vmatpush1.msra.mxu0 %v264
  %300 = vmatprep.subr.mxu0 %v267
  %301 = vmatpush1.msra.mxu0 %v266
  %302 = vmatprep.subr.mxu0 %v269
  %303 = vmatpush1.msra.mxu0 %v268
  %304 = vmatprep.subr.mxu0 %v271
  %305 = vmatpush1.msra.mxu0 %v270
  %306 = vmatprep.subr.mxu0 %v273
  %307 = vmatpush1.msra.mxu0 %v272
  %308 = vmatprep.subr.mxu0 %v275
  %309 = vmatpush1.msra.mxu0 %v274
  %310 = vmatprep.subr.mxu0 %v282
  %311 = vmatpush1.msra.mxu0 %v279
  %312 = vmatprep.subr.mxu0 0.0
  %313 = vmatpush1.msra.mxu0 0.0
  %314 = vmatprep.subr.mxu0 0.0
  %315 = vmatpush1.msra.mxu0 0.0
  %316 = vmatprep.subr.mxu0 0.0
  %317 = vmatpush1.msra.mxu0 0.0
  %318 = vmatprep.subr.mxu0 0.0
  %319 = vmatpush1.msra.mxu0 0.0
  %320 = vmatprep.subr.mxu0 0.0
  %321 = vmatpush1.msra.mxu0 0.0
  %322 = vmatprep.subr.mxu0 0.0
  %323 = vmatpush1.msra.mxu0 0.0
  %324 = vmatprep.subr.mxu0 0.0
  %325 = vmatpush1.msra.mxu0 0.0
  %326 = vmatprep.subr.mxu0 0.0
  %327 = vmatpush1.msra.mxu0 0.0
  %328 = vmatprep.subr.mxu0 0.0
  %329 = vmatpush1.msra.mxu0 0.0
  %330 = vmatprep.subr.mxu0 0.0
  %331 = vmatpush1.msra.mxu0 0.0
  %332 = vmatprep.subr.mxu0 0.0
  %333 = vmatpush1.msra.mxu0 0.0
  %334 = vmatprep.subr.mxu0 0.0
  %335 = vmatpush1.msra.mxu0 0.0
  %336 = vmatprep.subr.mxu0 0.0
  %337 = vmatpush1.msra.mxu0 0.0
  %338 = vmatprep.subr.mxu0 0.0
  %339 = vmatpush1.msra.mxu0 0.0
  %340 = vmatprep.subr.mxu0 0.0
  %341 = vmatpush1.msra.mxu0 0.0
  %342 = vmatprep.subr.mxu0 0.0
  %343 = vmatpush1.msra.mxu0 0.0
  %344 = vmatprep.subr.mxu0 0.0
  %345 = vmatpush1.msra.mxu0 0.0
  %346 = vmatprep.subr.mxu0 0.0
  %347 = vmatpush1.msra.mxu0 0.0
  %348 = vmatprep.mubr.f32.mxu0 0.0
  %349 = vmatmul.mubr.f32.gmra.mrb[0].mxu0 %v134
  %v350 = vpop.f32.mrb[0].mxu0
  %v351 = vadd.f32 0.0, %v350
  %v352 = vpop.f32.mrb[0].mxu0
  %v353 = vadd.f32 0.0, %v352
  %354 = vmatprep.mubr.f32.mxu0 0.0
  %355 = vmatmul.mubr.f32.gmra.mrb[0].mxu0 %v137
  %v356 = vpop.f32.mrb[0].mxu0
  %v357 = vadd.f32 0.0, %v356
  %v358 = vpop.f32.mrb[0].mxu0
  %v359 = vadd.f32 0.0, %v358
  %360 = vdwg.mxu0
  %v363 = vrot.slane %v351, 4
  %v364 = vrot.slane %v353, 4
  %v367 = vsub.f32 %v351, %v363
  %v368 = vsub.f32 %v353, %v364
  %v369 = vxor.u32 %v357, 2147483648
  %v370 = vxor.u32 %v359, 2147483648
  %v371 = vmul.f32 %v369, 1.442695
  %v372 = vpow.pop %v371
  %v373 = vmul.f32 %v370, 1.442695
  %v374 = vpow.pop %v373
  %v375 = vadd.f32 %v372, 1.0
  %v376 = vadd.f32 %v374, 1.0
  %v377 = vrcp.pop %v375
  %v378 = vmul.f32 1.0, %v377
  %v379 = vrcp.pop %v376
  %v380 = vmul.f32 1.0, %v379
  %v381 = vmul.f32 %v367, %v378
  %v382 = vmul.f32 %v368, %v380
  %v385 = vcombine.low %v381, %v382
  %s387 = scalar_lea.vmem %s6, 8
  %388 = vst [vmem:[%s387] sm:$0xff] %v385
  // Predicated region
  $region22: #{model_forward.1} parent=0 // pred_check
    _
  $region23: #{model_forward.1} parent=0 // pred_check_branch
    %390 = sbr.rel (0) target = $region25
  $region24: #{model_forward.1} parent=0 // pred_region
    _
  $region25: #{model_forward.1} parent=0 // pred_fallthru
    _
  // Predicated region
  $region26: #{model_forward.1} parent=0 // pred_check
    _
  $region27: #{model_forward.1} parent=0 // pred_check_branch
    %392 = sbr.rel (0) target = $region29
  $region28: #{model_forward.1} parent=0 // pred_region
    _
  $region29: #{model_forward.1} parent=0 // pred_fallthru
    _
  // Predicated region
  $region30: #{model_forward.1} parent=0 // pred_check
    _
  $region31: #{model_forward.1} parent=0 // pred_check_branch
    %394 = sbr.rel (0) target = $region33
  $region32: #{model_forward.1} parent=0 // pred_region
    _
  $region33: #{model_forward.1} parent=0 // pred_fallthru
    _
  // Predicated region
  $region34: #{model_forward.1} parent=0 // pred_check
    _
  $region35: #{model_forward.1} parent=0 // pred_check_branch
    %396 = sbr.rel (0) target = $region37
  $region36: #{model_forward.1} parent=0 // pred_region
    _
  $region37: #{model_forward.1} parent=0 // pred_fallthru
    _

</llo_original>
